<compile_context>
chip_gen: v7x
topology: tpu7x:2x2x1
jax: 0.10.0
libtpu: 0.0.40
codegen_flags: <defaults>
</compile_context>

<pallas_src>
import math
import functools

import jax
import jax.numpy as jnp
from jax.experimental import pallas as pl
from jax.experimental.pallas import tpu as pltpu

_LN_EPS = 1e-5  # PyTorch nn.LayerNorm default


# ----------------------------------------------------------------------------
# Kernel bodies
# ----------------------------------------------------------------------------
def _pfa_compute(x_ref, wsq_ref, vec_ref, *, n_pts: int, block_b: int):
    """Shared forward computation; returns the normalized (rows, H) output."""
    H = x_ref.shape[-1]
    rows = block_b * n_pts
    cdt = wsq_ref.dtype                        # matmul operand dtype (f32/bf16)

    def layernorm(v, g, b):
        m = jnp.mean(v, axis=-1, keepdims=True)
        c = v - m
        var = jnp.mean(c * c, axis=-1, keepdims=True)
        return c * jax.lax.rsqrt(var + _LN_EPS) * g + b

    def ln_relu(v, g, b):
        return jnp.maximum(layernorm(v, g, b), 0.0)

    def mm(a, w_idx):
        # Index the weight ref lazily so the (H,H) operand streams from VMEM
        # into the MXU; accumulate in f32.
        return jnp.dot(a.astype(cdt), wsq_ref[w_idx],
                       preferred_element_type=jnp.float32)

    # ---- fc1: Linear -> LN -> ReLU -> Linear -> LN -> ReLU -----------------
    h = ln_relu(mm(x_ref[...], 0) + vec_ref[0], vec_ref[1], vec_ref[2])
    h = ln_relu(mm(h, 1) + vec_ref[3], vec_ref[4], vec_ref[5])

    # ---- fc2 first layer on [h ; maxpool(h)] without a lane concat ---------
    h3 = h.reshape(block_b, n_pts, H)
    agg = jnp.max(h3, axis=1)                            # (block_b, H)
    f_h = mm(h, 2)                                       # (rows, H)
    f_agg = mm(agg, 3)                                   # (block_b, H)
    f = (f_h.reshape(block_b, n_pts, H) + f_agg[:, None, :]).reshape(rows, H)
    f = ln_relu(f + vec_ref[6], vec_ref[7], vec_ref[8])
    f = ln_relu(mm(f, 4) + vec_ref[9], vec_ref[10], vec_ref[11])

    # ---- residual (re-read x: keep its live range short) + final LN --------
    return layernorm(x_ref[...] + f, vec_ref[12], vec_ref[13])


def _pfa_full_kernel(x_ref, wsq_ref, vec_ref, out_ref, *, n_pts, block_b):
    y = _pfa_compute(x_ref, wsq_ref, vec_ref, n_pts=n_pts, block_b=block_b)
    out_ref[...] = y.astype(out_ref.dtype)


def _pfa_pool_kernel(x_ref, wsq_ref, vec_ref, pool_ref, *, n_pts, block_b):
    # aggre_out path: only the pooled result is written back to HBM.
    y = _pfa_compute(x_ref, wsq_ref, vec_ref, n_pts=n_pts, block_b=block_b)
    H = y.shape[-1]
    pool_ref[...] = jnp.max(y.reshape(block_b, n_pts, H), axis=1,
                            keepdims=True).astype(pool_ref.dtype)


# ----------------------------------------------------------------------------
# Wrapper
# ----------------------------------------------------------------------------
def _vmem_cap_bytes() -> int:
    """Generation-aware VMEM ceiling: 75% of the physical per-core capacity."""
    try:
        cap = int(pltpu.get_tpu_info().vmem_capacity_bytes)
    except Exception:
        cap = 64 * 1024 * 1024          # conservative fallback (v7x per-core)
    return max(int(0.75 * cap), 8 * 1024 * 1024)


def _pick_block_b(B: int, N: int, H: int, *, param_bytes: int,
                  vmem_cap_bytes: int) -> int:
    """Largest batch-divisor block whose double-buffered (rows, H) in/out
    blocks plus resident params fit in ~half the usable VMEM, while keeping
    >=2 grid steps so the 'parallel' batch axis can shard across v7x's two
    TensorCores (harmless one extra step on single-TC v5e/v6e)."""
    usable = max(vmem_cap_bytes // 2 - 2 * param_bytes, 2 * 1024 * 1024)
    budget = usable // 4                       # 2 input + 2 output buffers
    aligned = [c for c in range(1, B + 1)
               if B % c == 0 and (c == B or (c * N) % 8 == 0)]
    in_budget = [c for c in aligned if c * N * H * 4 <= budget]
    cands = in_budget if in_budget else aligned[:1]
    best = max(cands)
    if best == B and B > 1:
        smaller = [c for c in cands if c < B]
        if smaller:
            best = max(smaller)
    return best


def point_feature_aggregator_pallas(x, params, *, aggre_out: bool,
                                    block_b=None,
                                    use_bf16_matmul: bool = False,
                                    single_buffer_params: bool = False):
    """x: (B, N, H) float32.
    Returns (B, N, H) if not aggre_out else squeeze of the pooled (B, 1, H)."""
    B, N, H = x.shape
    w_dtype = jnp.bfloat16 if use_bf16_matmul else jnp.float32
    w_item = 2 if use_bf16_matmul else 4
    param_bytes = 5 * H * H * w_item + 14 * H * 4

    vmem_cap = _vmem_cap_bytes()
    if block_b is None:
        block_b = _pick_block_b(B, N, H, param_bytes=param_bytes,
                                vmem_cap_bytes=vmem_cap)
    assert B % block_b == 0, "block_b must divide the batch size"
    rows_blk = block_b * N
    grid = (B // block_b,)

    # Pack weights: pre-transpose so the kernel does plain row @ W matmuls,
    # and split fc2's (2H,H) weight into its x-half and agg-half so the lane
    # concat is never materialized.
    w2a_t = params["w2a"].T                                 # (2H, H)
    wsq = jnp.stack([
        params["w1a"].T, params["w1b"].T,
        w2a_t[:H, :], w2a_t[H:, :],
        params["w2b"].T,
    ]).astype(w_dtype)                                      # (5, H, H)
    vec = jnp.stack([
        params["b1a"], params["g1a"], params["be1a"],
        params["b1b"], params["g1b"], params["be1b"],
        params["b2a"], params["g2a"], params["be2a"],
        params["b2b"], params["g2b"], params["be2b"],
        params["gn"], params["ben"],
    ]).astype(jnp.float32)                                  # (14, H)

    x2d = x.reshape(B * N, H).astype(jnp.float32)

    # Explicit, generation-aware VMEM budget.
    blk_bytes = rows_blk * H * 4
    out_blk_bytes = (block_b * H * 4) if aggre_out else blk_bytes
    param_bufs = 1 if single_buffer_params else 2
    resident = 2 * blk_bytes + 2 * out_blk_bytes + param_bufs * param_bytes
    vmem_limit = int(min(max(resident + 8 * blk_bytes, 16 * 1024 * 1024),
                         vmem_cap))

    # Constant-index param blocks: optionally single-buffer them (their
    # index_map never changes, so extra buffers buy nothing).
    pm = {"pipeline_mode": pl.Buffered(1)} if single_buffer_params else {}
    in_specs = [
        pl.BlockSpec((rows_blk, H), lambda b: (b, 0)),        # x rows
        pl.BlockSpec((5, H, H), lambda b: (0, 0, 0), **pm),   # packed weights
        pl.BlockSpec((14, H), lambda b: (0, 0), **pm),        # packed vectors
    ]

    if aggre_out:
        kernel = functools.partial(_pfa_pool_kernel, n_pts=N, block_b=block_b)
        out_shape = jax.ShapeDtypeStruct((B, 1, H), x.dtype)
        out_specs = pl.BlockSpec((block_b, 1, H), lambda b: (b, 0, 0))
    else:
        kernel = functools.partial(_pfa_full_kernel, n_pts=N, block_b=block_b)
        out_shape = jax.ShapeDtypeStruct((B * N, H), x.dtype)
        out_specs = pl.BlockSpec((rows_blk, H), lambda b: (b, 0))

    res = pl.pallas_call(
        kernel,
        out_shape=out_shape,
        grid_spec=pltpu.PrefetchScalarGridSpec(
            num_scalar_prefetch=0,
            grid=grid,
            in_specs=in_specs,
            out_specs=out_specs,
        ),
        compiler_params=pltpu.CompilerParams(
            dimension_semantics=("parallel",),
            vmem_limit_bytes=vmem_limit,
        ),
    )(x2d, wsq, vec)

    if aggre_out:
        return jnp.squeeze(res)   # matches torch .squeeze(): (B,H), or (H,) if B==1
    return res.reshape(B, N, H)


# ----------------------------------------------------------------------------
# Pure-JAX reference mirroring the PyTorch forward (eval mode)
# ----------------------------------------------------------------------------
def point_feature_aggregator_reference(x, params, *, aggre_out: bool):
    def layernorm(v, g, b):
        m = jnp.mean(v, axis=-1, keepdims=True)
        c = v - m
        var = jnp.mean(c * c, axis=-1, keepdims=True)
        return c * jax.lax.rsqrt(var + _LN_EPS) * g + b

    h = x @ params["w1a"].T + params["b1a"]
    h = jnp.maximum(layernorm(h, params["g1a"], params["be1a"]), 0.0)
    h = h @ params["w1b"].T + params["b1b"]
    h = jnp.maximum(layernorm(h, params["g1b"], params["be1b"]), 0.0)

    agg = jnp.max(h, axis=1, keepdims=True)
    cat = jnp.concatenate([h, jnp.broadcast_to(agg, h.shape)], axis=-1)

    f = cat @ params["w2a"].T + params["b2a"]
    f = jnp.maximum(layernorm(f, params["g2a"], params["be2a"]), 0.0)
    f = f @ params["w2b"].T + params["b2b"]
    f = jnp.maximum(layernorm(f, params["g2b"], params["be2b"]), 0.0)

    out = layernorm(x + f, params["gn"], params["ben"])
    if aggre_out:
        return jnp.squeeze(jnp.max(out, axis=1, keepdims=True))
    return out


def init_params(key, hidden):
    ks = jax.random.split(key, 16)
    s = 1.0 / math.sqrt(hidden)
    s2 = 1.0 / math.sqrt(2 * hidden)
    u = lambda k, shape, sc: jax.random.uniform(k, shape, jnp.float32, -sc, sc)
    g = lambda k, shape: 1.0 + 0.1 * jax.random.normal(k, shape, jnp.float32)
    b = lambda k, shape: 0.1 * jax.random.normal(k, shape, jnp.float32)
    return {
        "w1a": u(ks[0], (hidden, hidden), s),      "b1a": u(ks[1], (hidden,), s),
        "g1a": g(ks[2], (hidden,)),                "be1a": b(ks[3], (hidden,)),
        "w1b": u(ks[4], (hidden, hidden), s),      "b1b": u(ks[5], (hidden,), s),
        "g1b": g(ks[6], (hidden,)),                "be1b": b(ks[7], (hidden,)),
        "w2a": u(ks[8], (hidden, 2 * hidden), s2), "b2a": u(ks[9], (hidden,), s2),
        "g2a": g(ks[10], (hidden,)),               "be2a": b(ks[11], (hidden,)),
        "w2b": u(ks[12], (hidden, hidden), s),     "b2b": u(ks[13], (hidden,), s),
        "g2b": g(ks[14], (hidden,)),               "be2b": b(ks[15], (hidden,)),
        "gn": jnp.ones((hidden,), jnp.float32),    "ben": jnp.zeros((hidden,), jnp.float32),
    }


if __name__ == "__main__":
    B, N, H = 2, 16, 32   # batch, points per element, hidden_size

    root = jax.random.PRNGKey(0)
    k_param, k_x = jax.random.split(root)
    params = init_params(k_param, H)
    x = jax.random.normal(k_x, (B, N, H), jnp.float32)

    # aggre_out=False path (full (B, N, H) output), f32 matmuls -> tight check.
    out = point_feature_aggregator_pallas(x, params, aggre_out=False)
    out = jax.block_until_ready(out)
    ref = point_feature_aggregator_reference(x, params, aggre_out=False)
    assert out.shape == (B, N, H)
    assert jnp.allclose(out, ref, atol=1e-4, rtol=1e-4), "mismatch vs reference (aggre_out=False)"

    # aggre_out=True path: pooled-only kernel (no full-activation HBM writeback).
    out_pool = point_feature_aggregator_pallas(x, params, aggre_out=True)
    out_pool = jax.block_until_ready(out_pool)
    ref_pool = point_feature_aggregator_reference(x, params, aggre_out=True)
    assert out_pool.shape == (B, H)
    assert jnp.allclose(out_pool, ref_pool, atol=1e-4, rtol=1e-4), "mismatch vs reference (aggre_out=True)"

    # bf16 MXU-operand path (production perf path); f32 accumulation & f32
    # elementwise math, so only a loose tolerance vs. the f32 reference.
    out_bf16 = point_feature_aggregator_pallas(x, params, aggre_out=False,
                                               use_bf16_matmul=True)
    out_bf16 = jax.block_until_ready(out_bf16)
    assert jnp.allclose(out_bf16, ref, atol=2e-1, rtol=1e-1), "bf16 path mismatch"

    print("KERNEL_OK")
</pallas_src>

<mosaic_0001>
module attributes {stable_mosaic.version = 11 : i64} {
  func.func @_pfa_full_kernel(%arg0: i32, %arg1: memref<16x32xf32, #tpu.memory_space<vmem>>, %arg2: memref<5x32x32xf32, #tpu.memory_space<vmem>>, %arg3: memref<14x32xf32, #tpu.memory_space<vmem>>, %arg4: memref<16x32xf32, #tpu.memory_space<vmem>>) attributes {dimension_semantics = [#tpu.dimension_semantics<parallel>], iteration_bounds = array<i64: 2>, scalar_prefetch = 0 : i64, scratch_operands = 0 : i64, tpu.core_type = #tpu.core_type<tc>, window_params = [{transform_indices = @transform_0, window_bounds = array<i64: 16, 32>}, {pipeline_mode = #tpu.pipeline_mode<synchronous>, transform_indices = @transform_1, window_bounds = array<i64: 5, 32, 32>}, {pipeline_mode = #tpu.pipeline_mode<synchronous>, transform_indices = @transform_2, window_bounds = array<i64: 14, 32>}, {transform_indices = @transform_3, window_bounds = array<i64: 16, 32>}]} {
    %c0 = arith.constant 0 : index
    %c0_0 = arith.constant 0 : index
    %0 = vector.load %arg1[%c0, %c0_0] : memref<16x32xf32, #tpu.memory_space<vmem>>, vector<16x32xf32>
    %c0_1 = arith.constant 0 : index
    %c0_2 = arith.constant 0 : index
    %c0_3 = arith.constant 0 : index
    %1 = vector.load %arg2[%c0_1, %c0_2, %c0_3] : memref<5x32x32xf32, #tpu.memory_space<vmem>>, vector<1x32x32xf32>
    %2 = vector.shape_cast %1 : vector<1x32x32xf32> to vector<32x32xf32>
    %cst = arith.constant dense<0.000000e+00> : vector<16x32xf32>
    %3 = tpu.matmul %0, %2, %cst {dimension_numbers = #tpu.dot_dimension_numbers<[1], [0], [0], [1], [0, 0, 1, 1], [], []>} : vector<16x32xf32>, vector<32x32xf32>, vector<16x32xf32> -> vector<16x32xf32>
    %c0_4 = arith.constant 0 : index
    %c0_5 = arith.constant 0 : index
    %4 = vector.load %arg3[%c0_4, %c0_5] : memref<14x32xf32, #tpu.memory_space<vmem>>, vector<1x32xf32>
    %5 = vector.shape_cast %4 : vector<1x32xf32> to vector<32xf32>
    %6 = vector.shape_cast %5 : vector<32xf32> to vector<1x32xf32>
    %7 = vector.broadcast %6 : vector<1x32xf32> to vector<16x32xf32>
    %8 = arith.addf %3, %7 : vector<16x32xf32>
    %c1 = arith.constant 1 : index
    %c0_6 = arith.constant 0 : index
    %9 = vector.load %arg3[%c1, %c0_6] : memref<14x32xf32, #tpu.memory_space<vmem>>, vector<1x32xf32>
    %10 = vector.shape_cast %9 : vector<1x32xf32> to vector<32xf32>
    %c2 = arith.constant 2 : index
    %c0_7 = arith.constant 0 : index
    %11 = vector.load %arg3[%c2, %c0_7] : memref<14x32xf32, #tpu.memory_space<vmem>>, vector<1x32xf32>
    %12 = vector.shape_cast %11 : vector<1x32xf32> to vector<32xf32>
    %cst_8 = arith.constant dense<0.000000e+00> : vector<16xf32>
    %13 = vector.multi_reduction <add>, %8, %cst_8 [1] : vector<16x32xf32> to vector<16xf32>
    %14 = vector.shape_cast %13 : vector<16xf32> to vector<16x1xf32>
    %cst_9 = arith.constant 3.200000e+01 : f32
    %15 = vector.broadcast %cst_9 : f32 to vector<16x1xf32>
    %16 = arith.divf %14, %15 : vector<16x1xf32>
    %17 = vector.broadcast %16 : vector<16x1xf32> to vector<16x32xf32>
    %18 = arith.subf %8, %17 : vector<16x32xf32>
    %19 = arith.mulf %18, %18 : vector<16x32xf32>
    %cst_10 = arith.constant dense<0.000000e+00> : vector<16xf32>
    %20 = vector.multi_reduction <add>, %19, %cst_10 [1] : vector<16x32xf32> to vector<16xf32>
    %21 = vector.shape_cast %20 : vector<16xf32> to vector<16x1xf32>
    %cst_11 = arith.constant 3.200000e+01 : f32
    %22 = vector.broadcast %cst_11 : f32 to vector<16x1xf32>
    %23 = arith.divf %21, %22 : vector<16x1xf32>
    %cst_12 = arith.constant 9.99999974E-6 : f32
    %24 = vector.broadcast %cst_12 : f32 to vector<16x1xf32>
    %25 = arith.addf %23, %24 : vector<16x1xf32>
    %26 = math.rsqrt %25 : vector<16x1xf32>
    %27 = vector.broadcast %26 : vector<16x1xf32> to vector<16x32xf32>
    %28 = arith.mulf %18, %27 : vector<16x32xf32>
    %29 = vector.shape_cast %10 : vector<32xf32> to vector<1x32xf32>
    %30 = vector.broadcast %29 : vector<1x32xf32> to vector<16x32xf32>
    %31 = arith.mulf %28, %30 : vector<16x32xf32>
    %32 = vector.shape_cast %12 : vector<32xf32> to vector<1x32xf32>
    %33 = vector.broadcast %32 : vector<1x32xf32> to vector<16x32xf32>
    %34 = arith.addf %31, %33 : vector<16x32xf32>
    %cst_13 = arith.constant 0.000000e+00 : f32
    %35 = vector.broadcast %cst_13 : f32 to vector<16x32xf32>
    %36 = arith.maximumf %34, %35 : vector<16x32xf32>
    %c1_14 = arith.constant 1 : index
    %c0_15 = arith.constant 0 : index
    %c0_16 = arith.constant 0 : index
    %37 = vector.load %arg2[%c1_14, %c0_15, %c0_16] : memref<5x32x32xf32, #tpu.memory_space<vmem>>, vector<1x32x32xf32>
    %38 = vector.shape_cast %37 : vector<1x32x32xf32> to vector<32x32xf32>
    %cst_17 = arith.constant dense<0.000000e+00> : vector<16x32xf32>
    %39 = tpu.matmul %36, %38, %cst_17 {dimension_numbers = #tpu.dot_dimension_numbers<[1], [0], [0], [1], [0, 0, 1, 1], [], []>} : vector<16x32xf32>, vector<32x32xf32>, vector<16x32xf32> -> vector<16x32xf32>
    %c3 = arith.constant 3 : index
    %c0_18 = arith.constant 0 : index
    %40 = vector.load %arg3[%c3, %c0_18] : memref<14x32xf32, #tpu.memory_space<vmem>>, vector<1x32xf32>
    %41 = vector.shape_cast %40 : vector<1x32xf32> to vector<32xf32>
    %42 = vector.shape_cast %41 : vector<32xf32> to vector<1x32xf32>
    %43 = vector.broadcast %42 : vector<1x32xf32> to vector<16x32xf32>
    %44 = arith.addf %39, %43 : vector<16x32xf32>
    %c4 = arith.constant 4 : index
    %c0_19 = arith.constant 0 : index
    %45 = vector.load %arg3[%c4, %c0_19] : memref<14x32xf32, #tpu.memory_space<vmem>>, vector<1x32xf32>
    %46 = vector.shape_cast %45 : vector<1x32xf32> to vector<32xf32>
    %c5 = arith.constant 5 : index
    %c0_20 = arith.constant 0 : index
    %47 = vector.load %arg3[%c5, %c0_20] : memref<14x32xf32, #tpu.memory_space<vmem>>, vector<1x32xf32>
    %48 = vector.shape_cast %47 : vector<1x32xf32> to vector<32xf32>
    %cst_21 = arith.constant dense<0.000000e+00> : vector<16xf32>
    %49 = vector.multi_reduction <add>, %44, %cst_21 [1] : vector<16x32xf32> to vector<16xf32>
    %50 = vector.shape_cast %49 : vector<16xf32> to vector<16x1xf32>
    %cst_22 = arith.constant 3.200000e+01 : f32
    %51 = vector.broadcast %cst_22 : f32 to vector<16x1xf32>
    %52 = arith.divf %50, %51 : vector<16x1xf32>
    %53 = vector.broadcast %52 : vector<16x1xf32> to vector<16x32xf32>
    %54 = arith.subf %44, %53 : vector<16x32xf32>
    %55 = arith.mulf %54, %54 : vector<16x32xf32>
    %cst_23 = arith.constant dense<0.000000e+00> : vector<16xf32>
    %56 = vector.multi_reduction <add>, %55, %cst_23 [1] : vector<16x32xf32> to vector<16xf32>
    %57 = vector.shape_cast %56 : vector<16xf32> to vector<16x1xf32>
    %cst_24 = arith.constant 3.200000e+01 : f32
    %58 = vector.broadcast %cst_24 : f32 to vector<16x1xf32>
    %59 = arith.divf %57, %58 : vector<16x1xf32>
    %cst_25 = arith.constant 9.99999974E-6 : f32
    %60 = vector.broadcast %cst_25 : f32 to vector<16x1xf32>
    %61 = arith.addf %59, %60 : vector<16x1xf32>
    %62 = math.rsqrt %61 : vector<16x1xf32>
    %63 = vector.broadcast %62 : vector<16x1xf32> to vector<16x32xf32>
    %64 = arith.mulf %54, %63 : vector<16x32xf32>
    %65 = vector.shape_cast %46 : vector<32xf32> to vector<1x32xf32>
    %66 = vector.broadcast %65 : vector<1x32xf32> to vector<16x32xf32>
    %67 = arith.mulf %64, %66 : vector<16x32xf32>
    %68 = vector.shape_cast %48 : vector<32xf32> to vector<1x32xf32>
    %69 = vector.broadcast %68 : vector<1x32xf32> to vector<16x32xf32>
    %70 = arith.addf %67, %69 : vector<16x32xf32>
    %cst_26 = arith.constant 0.000000e+00 : f32
    %71 = vector.broadcast %cst_26 : f32 to vector<16x32xf32>
    %72 = arith.maximumf %70, %71 : vector<16x32xf32>
    %73 = vector.shape_cast %72 : vector<16x32xf32> to vector<1x16x32xf32>
    %cst_27 = arith.constant dense<0xFF800000> : vector<1x32xf32>
    %74 = vector.multi_reduction <maximumf>, %73, %cst_27 [1] : vector<1x16x32xf32> to vector<1x32xf32>
    %c2_28 = arith.constant 2 : index
    %c0_29 = arith.constant 0 : index
    %c0_30 = arith.constant 0 : index
    %75 = vector.load %arg2[%c2_28, %c0_29, %c0_30] : memref<5x32x32xf32, #tpu.memory_space<vmem>>, vector<1x32x32xf32>
    %76 = vector.shape_cast %75 : vector<1x32x32xf32> to vector<32x32xf32>
    %cst_31 = arith.constant dense<0.000000e+00> : vector<16x32xf32>
    %77 = tpu.matmul %72, %76, %cst_31 {dimension_numbers = #tpu.dot_dimension_numbers<[1], [0], [0], [1], [0, 0, 1, 1], [], []>} : vector<16x32xf32>, vector<32x32xf32>, vector<16x32xf32> -> vector<16x32xf32>
    %c3_32 = arith.constant 3 : index
    %c0_33 = arith.constant 0 : index
    %c0_34 = arith.constant 0 : index
    %78 = vector.load %arg2[%c3_32, %c0_33, %c0_34] : memref<5x32x32xf32, #tpu.memory_space<vmem>>, vector<1x32x32xf32>
    %79 = vector.shape_cast %78 : vector<1x32x32xf32> to vector<32x32xf32>
    %cst_35 = arith.constant dense<0.000000e+00> : vector<1x32xf32>
    %80 = tpu.matmul %74, %79, %cst_35 {dimension_numbers = #tpu.dot_dimension_numbers<[1], [0], [0], [1], [0, 0, 1, 1], [], []>} : vector<1x32xf32>, vector<32x32xf32>, vector<1x32xf32> -> vector<1x32xf32>
    %81 = vector.shape_cast %77 : vector<16x32xf32> to vector<1x16x32xf32>
    %82 = vector.shape_cast %80 : vector<1x32xf32> to vector<1x1x32xf32>
    %83 = vector.broadcast %82 : vector<1x1x32xf32> to vector<1x16x32xf32>
    %84 = arith.addf %81, %83 : vector<1x16x32xf32>
    %85 = vector.shape_cast %84 : vector<1x16x32xf32> to vector<16x32xf32>
    %c6 = arith.constant 6 : index
    %c0_36 = arith.constant 0 : index
    %86 = vector.load %arg3[%c6, %c0_36] : memref<14x32xf32, #tpu.memory_space<vmem>>, vector<1x32xf32>
    %87 = vector.shape_cast %86 : vector<1x32xf32> to vector<32xf32>
    %88 = vector.shape_cast %87 : vector<32xf32> to vector<1x32xf32>
    %89 = vector.broadcast %88 : vector<1x32xf32> to vector<16x32xf32>
    %90 = arith.addf %85, %89 : vector<16x32xf32>
    %c7 = arith.constant 7 : index
    %c0_37 = arith.constant 0 : index
    %91 = vector.load %arg3[%c7, %c0_37] : memref<14x32xf32, #tpu.memory_space<vmem>>, vector<1x32xf32>
    %92 = vector.shape_cast %91 : vector<1x32xf32> to vector<32xf32>
    %c8 = arith.constant 8 : index
    %c0_38 = arith.constant 0 : index
    %93 = vector.load %arg3[%c8, %c0_38] : memref<14x32xf32, #tpu.memory_space<vmem>>, vector<1x32xf32>
    %94 = vector.shape_cast %93 : vector<1x32xf32> to vector<32xf32>
    %cst_39 = arith.constant dense<0.000000e+00> : vector<16xf32>
    %95 = vector.multi_reduction <add>, %90, %cst_39 [1] : vector<16x32xf32> to vector<16xf32>
    %96 = vector.shape_cast %95 : vector<16xf32> to vector<16x1xf32>
    %cst_40 = arith.constant 3.200000e+01 : f32
    %97 = vector.broadcast %cst_40 : f32 to vector<16x1xf32>
    %98 = arith.divf %96, %97 : vector<16x1xf32>
    %99 = vector.broadcast %98 : vector<16x1xf32> to vector<16x32xf32>
    %100 = arith.subf %90, %99 : vector<16x32xf32>
    %101 = arith.mulf %100, %100 : vector<16x32xf32>
    %cst_41 = arith.constant dense<0.000000e+00> : vector<16xf32>
    %102 = vector.multi_reduction <add>, %101, %cst_41 [1] : vector<16x32xf32> to vector<16xf32>
    %103 = vector.shape_cast %102 : vector<16xf32> to vector<16x1xf32>
    %cst_42 = arith.constant 3.200000e+01 : f32
    %104 = vector.broadcast %cst_42 : f32 to vector<16x1xf32>
    %105 = arith.divf %103, %104 : vector<16x1xf32>
    %cst_43 = arith.constant 9.99999974E-6 : f32
    %106 = vector.broadcast %cst_43 : f32 to vector<16x1xf32>
    %107 = arith.addf %105, %106 : vector<16x1xf32>
    %108 = math.rsqrt %107 : vector<16x1xf32>
    %109 = vector.broadcast %108 : vector<16x1xf32> to vector<16x32xf32>
    %110 = arith.mulf %100, %109 : vector<16x32xf32>
    %111 = vector.shape_cast %92 : vector<32xf32> to vector<1x32xf32>
    %112 = vector.broadcast %111 : vector<1x32xf32> to vector<16x32xf32>
    %113 = arith.mulf %110, %112 : vector<16x32xf32>
    %114 = vector.shape_cast %94 : vector<32xf32> to vector<1x32xf32>
    %115 = vector.broadcast %114 : vector<1x32xf32> to vector<16x32xf32>
    %116 = arith.addf %113, %115 : vector<16x32xf32>
    %cst_44 = arith.constant 0.000000e+00 : f32
    %117 = vector.broadcast %cst_44 : f32 to vector<16x32xf32>
    %118 = arith.maximumf %116, %117 : vector<16x32xf32>
    %c4_45 = arith.constant 4 : index
    %c0_46 = arith.constant 0 : index
    %c0_47 = arith.constant 0 : index
    %119 = vector.load %arg2[%c4_45, %c0_46, %c0_47] : memref<5x32x32xf32, #tpu.memory_space<vmem>>, vector<1x32x32xf32>
    %120 = vector.shape_cast %119 : vector<1x32x32xf32> to vector<32x32xf32>
    %cst_48 = arith.constant dense<0.000000e+00> : vector<16x32xf32>
    %121 = tpu.matmul %118, %120, %cst_48 {dimension_numbers = #tpu.dot_dimension_numbers<[1], [0], [0], [1], [0, 0, 1, 1], [], []>} : vector<16x32xf32>, vector<32x32xf32>, vector<16x32xf32> -> vector<16x32xf32>
    %c9 = arith.constant 9 : index
    %c0_49 = arith.constant 0 : index
    %122 = vector.load %arg3[%c9, %c0_49] : memref<14x32xf32, #tpu.memory_space<vmem>>, vector<1x32xf32>
    %123 = vector.shape_cast %122 : vector<1x32xf32> to vector<32xf32>
    %124 = vector.shape_cast %123 : vector<32xf32> to vector<1x32xf32>
    %125 = vector.broadcast %124 : vector<1x32xf32> to vector<16x32xf32>
    %126 = arith.addf %121, %125 : vector<16x32xf32>
    %c10 = arith.constant 10 : index
    %c0_50 = arith.constant 0 : index
    %127 = vector.load %arg3[%c10, %c0_50] : memref<14x32xf32, #tpu.memory_space<vmem>>, vector<1x32xf32>
    %128 = vector.shape_cast %127 : vector<1x32xf32> to vector<32xf32>
    %c11 = arith.constant 11 : index
    %c0_51 = arith.constant 0 : index
    %129 = vector.load %arg3[%c11, %c0_51] : memref<14x32xf32, #tpu.memory_space<vmem>>, vector<1x32xf32>
    %130 = vector.shape_cast %129 : vector<1x32xf32> to vector<32xf32>
    %cst_52 = arith.constant dense<0.000000e+00> : vector<16xf32>
    %131 = vector.multi_reduction <add>, %126, %cst_52 [1] : vector<16x32xf32> to vector<16xf32>
    %132 = vector.shape_cast %131 : vector<16xf32> to vector<16x1xf32>
    %cst_53 = arith.constant 3.200000e+01 : f32
    %133 = vector.broadcast %cst_53 : f32 to vector<16x1xf32>
    %134 = arith.divf %132, %133 : vector<16x1xf32>
    %135 = vector.broadcast %134 : vector<16x1xf32> to vector<16x32xf32>
    %136 = arith.subf %126, %135 : vector<16x32xf32>
    %137 = arith.mulf %136, %136 : vector<16x32xf32>
    %cst_54 = arith.constant dense<0.000000e+00> : vector<16xf32>
    %138 = vector.multi_reduction <add>, %137, %cst_54 [1] : vector<16x32xf32> to vector<16xf32>
    %139 = vector.shape_cast %138 : vector<16xf32> to vector<16x1xf32>
    %cst_55 = arith.constant 3.200000e+01 : f32
    %140 = vector.broadcast %cst_55 : f32 to vector<16x1xf32>
    %141 = arith.divf %139, %140 : vector<16x1xf32>
    %cst_56 = arith.constant 9.99999974E-6 : f32
    %142 = vector.broadcast %cst_56 : f32 to vector<16x1xf32>
    %143 = arith.addf %141, %142 : vector<16x1xf32>
    %144 = math.rsqrt %143 : vector<16x1xf32>
    %145 = vector.broadcast %144 : vector<16x1xf32> to vector<16x32xf32>
    %146 = arith.mulf %136, %145 : vector<16x32xf32>
    %147 = vector.shape_cast %128 : vector<32xf32> to vector<1x32xf32>
    %148 = vector.broadcast %147 : vector<1x32xf32> to vector<16x32xf32>
    %149 = arith.mulf %146, %148 : vector<16x32xf32>
    %150 = vector.shape_cast %130 : vector<32xf32> to vector<1x32xf32>
    %151 = vector.broadcast %150 : vector<1x32xf32> to vector<16x32xf32>
    %152 = arith.addf %149, %151 : vector<16x32xf32>
    %cst_57 = arith.constant 0.000000e+00 : f32
    %153 = vector.broadcast %cst_57 : f32 to vector<16x32xf32>
    %154 = arith.maximumf %152, %153 : vector<16x32xf32>
    %c0_58 = arith.constant 0 : index
    %c0_59 = arith.constant 0 : index
    %155 = vector.load %arg1[%c0_58, %c0_59] : memref<16x32xf32, #tpu.memory_space<vmem>>, vector<16x32xf32>
    %156 = arith.addf %155, %154 : vector<16x32xf32>
    %c12 = arith.constant 12 : index
    %c0_60 = arith.constant 0 : index
    %157 = vector.load %arg3[%c12, %c0_60] : memref<14x32xf32, #tpu.memory_space<vmem>>, vector<1x32xf32>
    %158 = vector.shape_cast %157 : vector<1x32xf32> to vector<32xf32>
    %c13 = arith.constant 13 : index
    %c0_61 = arith.constant 0 : index
    %159 = vector.load %arg3[%c13, %c0_61] : memref<14x32xf32, #tpu.memory_space<vmem>>, vector<1x32xf32>
    %160 = vector.shape_cast %159 : vector<1x32xf32> to vector<32xf32>
    %cst_62 = arith.constant dense<0.000000e+00> : vector<16xf32>
    %161 = vector.multi_reduction <add>, %156, %cst_62 [1] : vector<16x32xf32> to vector<16xf32>
    %162 = vector.shape_cast %161 : vector<16xf32> to vector<16x1xf32>
    %cst_63 = arith.constant 3.200000e+01 : f32
    %163 = vector.broadcast %cst_63 : f32 to vector<16x1xf32>
    %164 = arith.divf %162, %163 : vector<16x1xf32>
    %165 = vector.broadcast %164 : vector<16x1xf32> to vector<16x32xf32>
    %166 = arith.subf %156, %165 : vector<16x32xf32>
    %167 = arith.mulf %166, %166 : vector<16x32xf32>
    %cst_64 = arith.constant dense<0.000000e+00> : vector<16xf32>
    %168 = vector.multi_reduction <add>, %167, %cst_64 [1] : vector<16x32xf32> to vector<16xf32>
    %169 = vector.shape_cast %168 : vector<16xf32> to vector<16x1xf32>
    %cst_65 = arith.constant 3.200000e+01 : f32
    %170 = vector.broadcast %cst_65 : f32 to vector<16x1xf32>
    %171 = arith.divf %169, %170 : vector<16x1xf32>
    %cst_66 = arith.constant 9.99999974E-6 : f32
    %172 = vector.broadcast %cst_66 : f32 to vector<16x1xf32>
    %173 = arith.addf %171, %172 : vector<16x1xf32>
    %174 = math.rsqrt %173 : vector<16x1xf32>
    %175 = vector.broadcast %174 : vector<16x1xf32> to vector<16x32xf32>
    %176 = arith.mulf %166, %175 : vector<16x32xf32>
    %177 = vector.shape_cast %158 : vector<32xf32> to vector<1x32xf32>
    %178 = vector.broadcast %177 : vector<1x32xf32> to vector<16x32xf32>
    %179 = arith.mulf %176, %178 : vector<16x32xf32>
    %180 = vector.shape_cast %160 : vector<32xf32> to vector<1x32xf32>
    %181 = vector.broadcast %180 : vector<1x32xf32> to vector<16x32xf32>
    %182 = arith.addf %179, %181 : vector<16x32xf32>
    %c0_67 = arith.constant 0 : index
    %c0_68 = arith.constant 0 : index
    %183 = vector.load %arg4[%c0_67, %c0_68] : memref<16x32xf32, #tpu.memory_space<vmem>>, vector<16x32xf32>
    tpu.vector_store %arg4[%c0_67, %c0_68], %182 {strides = array<i32>} : memref<16x32xf32, #tpu.memory_space<vmem>>, vector<16x32xf32>,
    return
  }
  func.func @transform_0(%arg0: i32) -> (i32, i32) {
    %c0_i32 = arith.constant 0 : i32
    %c0_i32_0 = arith.constant 0 : i32
    return %arg0, %c0_i32 : i32, i32
  }
  func.func @transform_1(%arg0: i32) -> (i32, i32, i32) {
    %c0_i32 = arith.constant 0 : i32
    %c0_i32_0 = arith.constant 0 : i32
    %c0_i32_1 = arith.constant 0 : i32
    %c0_i32_2 = arith.constant 0 : i32
    return %c0_i32, %c0_i32_0, %c0_i32_1 : i32, i32, i32
  }
  func.func @transform_2(%arg0: i32) -> (i32, i32) {
    %c0_i32 = arith.constant 0 : i32
    %c0_i32_0 = arith.constant 0 : i32
    %c0_i32_1 = arith.constant 0 : i32
    return %c0_i32, %c0_i32_0 : i32, i32
  }
  func.func @transform_3(%arg0: i32) -> (i32, i32) {
    %c0_i32 = arith.constant 0 : i32
    %c0_i32_0 = arith.constant 0 : i32
    return %arg0, %c0_i32 : i32, i32
  }
}

</mosaic_0001>

<llo_original>
// kernel: tpu_custom_call.1
$region0: #{tpu_custom_call.1}
  #allocation0 [shape = 'u32[]', space=smem, size = 0x4, offset = 0x4, fixed_abs, tag = 'smem constant byte address 0x4 - core index']
  #allocation1 [shape = 'u32[144,128]{1,0:T(1,128)}', space=vmem, size = 0x12000, scoped, tag = 'internal scratch']
  %s0 = inlined_call_operand.hbm [shape: f32[32,32], index: 0, kind: input, shape index: {}]
  %s1 = inlined_call_operand.hbm [shape: f32[5,32,32], index: 1, kind: input, shape index: {}]
  %s2 = inlined_call_operand.hbm [shape: f32[14,32], index: 2, kind: input, shape index: {}]
  %s3 = inlined_call_operand.hbm [shape: f32[32,32], index: 3, kind: output, shape index: {}]
  %s4 = sld [smem:[#allocation0]]
  $region57: #{tpu_custom_call.1} parent=0
    _
  %s6 = ssub.s32 1, %s4
  %s7 = scalar_select 0, %s6, %s4
  $region1: #{tpu_custom_call.1} parent=0
    #allocation2 [shape = 'u8[16384]{0}', space=vmem, size = 0x4000, scoped, tag = 'input window, operand 0']
    #allocation3 [shape = 's32[2]{0}', space=sflag, size = 0x8, scoped, tag = 'scoped memory for tpu_custom_call.1']
    #allocation4 [shape = 's32[2]{0}', space=sflag, size = 0x8, scoped, tag = 'scoped memory for tpu_custom_call.1']
    #allocation5 [shape = 'u8[81920]{0}', space=vmem, size = 0x14000, scoped, tag = 'input window, operand 1, single buffered']
    #allocation6 [shape = 's32[1]{0}', space=sflag, size = 0x4, scoped, tag = 'scoped memory for tpu_custom_call.1']
    #allocation7 [shape = 'u8[8192]{0}', space=vmem, size = 0x2000, scoped, tag = 'input window, operand 2, single buffered']
    #allocation8 [shape = 'u8[16384]{0}', space=vmem, size = 0x4000, scoped, tag = 'output window, operand 0']
    %8 = vsyncpa [#allocation3], 0
    %s9 = scalar_lea.sflag [#allocation3], 1
    %10 = vsyncpa %s9, 0
    %11 = vsyncpa [#allocation6], 0
    %12 = vsyncpa [#allocation4], 0
    %s13 = scalar_lea.sflag [#allocation4], 1
    %14 = vsyncpa %s13, 0
    loop: start=0, step=1, limit=4
    $region2: #{tpu_custom_call.1} parent=1 // loop_pre_header
      _
    $region3: #{tpu_custom_call.1} parent=1 // loop_header
      %s16 = sphi 0, %s20
      %p17 = scmp.ge.s32.totalorder %s16, 4
      %s26 = sphi 0, %s28
      %s29 = sphi 0, %s26
      %s30 = sphi 0, %s29
      %s46 = sphi 0, %s30
      %s50 = sphi 0, %s50
      %s52 = sphi 0, %s50
      %s53 = sphi 0, %s52
      %s67 = sphi 0, %s53
      %s71 = sphi 0, %s71
      %s73 = sphi 0, %s71
      %s74 = sphi 0, %s73
      %s88 = sphi 0, %s74
      %s94 = sphi 0, %s96
      %s97 = sphi 0, %s94
      %s98 = sphi 0, %s97
      %s114 = sphi 0, %s98
    $region4: #{tpu_custom_call.1} parent=1 // loop_header_branch
      %19 = sbr.rel (%p17) target = $region8
    $region5: #{tpu_custom_call.1} parent=1 // loop_body
      %s21 = ssub.s32 %s16, 1
      %s22 = ssub.s32 %s16, 2
      %s23 = sadd.s32 %s16, 1
      %s24 = ssub.s32 %s16, %s23
      %p25 = scmp.eq.s32.totalorder %s24, 0
      %s27 = sadd.s32 %s26, 1
      %s28 = scalar_select %p25, %s26, %s27
      %p31 = pneg %p25
      %p32 = scmp.eq.s32.totalorder %s16, 1
      %p33 = por %p31, %p32
      %p34 = scmp.ne.s32.totalorder %s26, %s29
      %p35 = scmp.eq.s32.totalorder %s16, 0
      %p36 = por %p34, %p35
      %p37 = scmp.ne.s32.totalorder %s26, %s29
      %p38 = scmp.eq.s32.totalorder %s21, 1
      %p39 = por %p37, %p38
      %p40 = scmp.ne.s32.totalorder %s29, %s30
      %p41 = scmp.eq.s32.totalorder %s21, 0
      %p42 = por %p40, %p41
      %p43 = scmp.ne.s32.totalorder %s29, %s30
      %p44 = scmp.eq.s32.totalorder %s22, 1
      %p45 = por %p43, %p44
      %p47 = scmp.ne.s32.totalorder %s30, %s46
      %p48 = scmp.eq.s32.totalorder %s22, 0
      %p49 = por %p47, %p48
      %s51 = sadd.s32 %s50, 1
      %p54 = scmp.eq.s32.totalorder %s16, 1
      %p55 = scmp.ne.s32.totalorder %s50, %s52
      %p56 = scmp.eq.s32.totalorder %s16, 0
      %p57 = por %p55, %p56
      %p58 = scmp.ne.s32.totalorder %s50, %s52
      %p59 = scmp.eq.s32.totalorder %s21, 1
      %p60 = por %p58, %p59
      %p61 = scmp.ne.s32.totalorder %s52, %s53
      %p62 = scmp.eq.s32.totalorder %s21, 0
      %p63 = por %p61, %p62
      %p64 = scmp.ne.s32.totalorder %s52, %s53
      %p65 = scmp.eq.s32.totalorder %s22, 1
      %p66 = por %p64, %p65
      %p68 = scmp.ne.s32.totalorder %s53, %s67
      %p69 = scmp.eq.s32.totalorder %s22, 0
      %p70 = por %p68, %p69
      %s72 = sadd.s32 %s71, 1
      %p75 = scmp.eq.s32.totalorder %s16, 1
      %p76 = scmp.ne.s32.totalorder %s71, %s73
      %p77 = scmp.eq.s32.totalorder %s16, 0
      %p78 = por %p76, %p77
      %p79 = scmp.ne.s32.totalorder %s71, %s73
      %p80 = scmp.eq.s32.totalorder %s21, 1
      %p81 = por %p79, %p80
      %p82 = scmp.ne.s32.totalorder %s73, %s74
      %p83 = scmp.eq.s32.totalorder %s21, 0
      %p84 = por %p82, %p83
      %p85 = scmp.ne.s32.totalorder %s73, %s74
      %p86 = scmp.eq.s32.totalorder %s22, 1
      %p87 = por %p85, %p86
      %p89 = scmp.ne.s32.totalorder %s74, %s88
      %p90 = scmp.eq.s32.totalorder %s22, 0
      %p91 = por %p89, %p90
      %s92 = ssub.s32 %s16, %s23
      %p93 = scmp.eq.s32.totalorder %s92, 0
      %s95 = sadd.s32 %s94, 1
      %s96 = scalar_select %p93, %s94, %s95
      %p99 = pneg %p93
      %p100 = scmp.eq.s32.totalorder %s16, 1
      %p101 = por %p99, %p100
      %p102 = scmp.ne.s32.totalorder %s94, %s97
      %p103 = scmp.eq.s32.totalorder %s16, 0
      %p104 = por %p102, %p103
      %p105 = scmp.ne.s32.totalorder %s94, %s97
      %p106 = scmp.eq.s32.totalorder %s21, 1
      %p107 = por %p105, %p106
      %p108 = scmp.ne.s32.totalorder %s97, %s98
      %p109 = scmp.eq.s32.totalorder %s21, 0
      %p110 = por %p108, %p109
      %p111 = scmp.ne.s32.totalorder %s97, %s98
      %p112 = scmp.eq.s32.totalorder %s22, 1
      %p113 = por %p111, %p112
      %p115 = scmp.ne.s32.totalorder %s98, %s114
      %p116 = scmp.eq.s32.totalorder %s22, 0
      %p117 = por %p115, %p116
      %p118 = scmp.le.s32.totalorder 1, %s16
      %p119 = scmp.lt.s32.totalorder %s16, 3
      %p120 = pnand %p118, %p119
      %p121 = pneg %p120
      // Predicated region
      $region9: #{tpu_custom_call.1} parent=5 // pred_check
        _
      $region10: #{tpu_custom_call.1} parent=5 // pred_check_branch
        %123 = sbr.rel (%p120) target = $region12
      $region11: #{tpu_custom_call.1} parent=5 // pred_region
        %s124 = ssub.s32 %s16, 1
        // Predicated region
        $region13: #{tpu_custom_call.1} parent=11 // pred_check
          %p125 = pneg %p63
        $region14: #{tpu_custom_call.1} parent=11 // pred_check_branch
          %127 = sbr.rel (%p125) target = $region16
        $region15: #{tpu_custom_call.1} parent=11 // pred_region
          %s129 = ssub.s32 2560, 2560
          %130 = vsyncadd [#allocation6], %s129
          %s131 = sshll.u32 [#allocation5], 4
          %s132 = int_to_ptr.vmem [resolvable:$true] %s131
          %137 = dma.hbm_to_vmem [thread:$0]  %s1, 2560, %s132, [#allocation6], 128, 128, 8
        $region16: #{tpu_custom_call.1} parent=11 // pred_fallthru
          _
        // Predicated region
        $region17: #{tpu_custom_call.1} parent=11 // pred_check
          %p138 = pneg %p84
        $region18: #{tpu_custom_call.1} parent=11 // pred_check_branch
          %140 = sbr.rel (%p138) target = $region20
        $region19: #{tpu_custom_call.1} parent=11 // pred_region
          %s142 = ssub.s32 256, 256
          %143 = vsyncadd [#allocation6], %s142
          %s144 = sshll.u32 [#allocation7], 4
          %s145 = int_to_ptr.vmem [resolvable:$true] %s144
          %150 = dma.hbm_to_vmem [thread:$0]  %s2, 256, %s145, [#allocation6], 128, 128, 8
        $region20: #{tpu_custom_call.1} parent=11 // pred_fallthru
          _
      $region12: #{tpu_custom_call.1} parent=5 // pred_fallthru
        _
      %p151 = scmp.lt.s32.totalorder %s16, 2
      // Predicated region
      $region21: #{tpu_custom_call.1} parent=5 // pred_check
        %p152 = pneg %p151
      $region22: #{tpu_custom_call.1} parent=5 // pred_check_branch
        %154 = sbr.rel (%p152) target = $region24
      $region23: #{tpu_custom_call.1} parent=5 // pred_region
        // Predicated region
        $region25: #{tpu_custom_call.1} parent=23 // pred_check
          %p155 = pneg %p36
        $region26: #{tpu_custom_call.1} parent=23 // pred_check_branch
          %157 = sbr.rel (%p155) target = $region28
        $region27: #{tpu_custom_call.1} parent=23 // pred_region
          %s158 = sand.u32 %s26, 1
          %s159 = scalar_lea.sflag [#allocation3], %s158
          %s160 = sand.u32 %s26, 1
          %s161 = smul.addr %s160, 16
          %s162 = scalar_lea.vmem [#allocation2], %s161
          %s163 = smul.u32 2, %s16
          %s165 = ssub.s32 256, 256
          %166 = vsyncadd %s159, %s165
          %s167 = smul.addr %s163, 128
          %s168 = scalar_lea.hbm %s0, %s167
          %s169 = sshll.u32 %s162, 4
          %s170 = int_to_ptr.vmem [resolvable:$true] %s169
          %175 = dma.hbm_to_vmem [thread:$0]  %s168, 256, %s170, %s159, 128, 128, 8
        $region28: #{tpu_custom_call.1} parent=23 // pred_fallthru
          _
      $region24: #{tpu_custom_call.1} parent=5 // pred_fallthru
        _
      %p176 = scmp.le.s32.totalorder 1, %s16
      %p177 = scmp.lt.s32.totalorder %s16, 3
      %p178 = pnand %p176, %p177
      %p179 = pneg %p178
      // Predicated region
      $region29: #{tpu_custom_call.1} parent=5 // pred_check
        _
      $region30: #{tpu_custom_call.1} parent=5 // pred_check_branch
        %181 = sbr.rel (%p178) target = $region32
      $region31: #{tpu_custom_call.1} parent=5 // pred_region
        %s182 = ssub.s32 %s16, 1
        %s183 = sand.u32 %s29, 1
        %s184 = scalar_lea.sflag [#allocation3], %s183
        %s185 = sand.u32 %s29, 1
        %s186 = smul.addr %s185, 16
        %s187 = scalar_lea.vmem [#allocation2], %s186
        // Predicated region
        $region33: #{tpu_custom_call.1} parent=31 // pred_check
          %p188 = pneg %p42
        $region34: #{tpu_custom_call.1} parent=31 // pred_check_branch
          %190 = sbr.rel (%p188) target = $region36
        $region35: #{tpu_custom_call.1} parent=31 // pred_region
          %191 = dma.done %s184, 256
        $region36: #{tpu_custom_call.1} parent=31 // pred_fallthru
          _
        // Predicated region
        $region37: #{tpu_custom_call.1} parent=31 // pred_check
          %p192 = pneg %p63
        $region38: #{tpu_custom_call.1} parent=31 // pred_check_branch
          %194 = sbr.rel (%p192) target = $region40
        $region39: #{tpu_custom_call.1} parent=31 // pred_region
          %195 = dma.done [#allocation6], 2560
        $region40: #{tpu_custom_call.1} parent=31 // pred_fallthru
          _
        // Predicated region
        $region41: #{tpu_custom_call.1} parent=31 // pred_check
          %p196 = pneg %p84
        $region42: #{tpu_custom_call.1} parent=31 // pred_check_branch
          %198 = sbr.rel (%p196) target = $region44
        $region43: #{tpu_custom_call.1} parent=31 // pred_region
          %199 = dma.done [#allocation6], 256
        $region44: #{tpu_custom_call.1} parent=31 // pred_fallthru
          _
        %s200 = sand.u32 %s29, 1
        %s201 = scalar_lea.sflag [#allocation3], %s200
        %s202 = sand.u32 %s29, 1
        %s203 = smul.addr %s202, 16
        %s204 = scalar_lea.vmem [#allocation2], %s203
        %p205 = pneg %p42
        %p206 = pneg %p39
        %p207 = pneg %p63
        %p208 = pneg %p60
        %p209 = pneg %p84
        %p210 = pneg %p81
        %p211 = pneg %p110
        %p212 = pneg %p107
        %s213 = sand.u32 %s97, 1
        %s214 = scalar_lea.sflag [#allocation4], %s213
        %s215 = sand.u32 %s97, 1
        %s216 = smul.addr %s215, 16
        %s217 = scalar_lea.vmem [#allocation8], %s216
        %s218 = smul.u32 2, %s21
        %s219 = smul.u32 2, %s21
        %v220 = vld [vmem:[%s187] sm:$0xff]
        %v221 = vld [vmem:[%s187 + $0x8] sm:$0xff]
        %v222 = vld [vmem:[#allocation5] sm:$0xff]
        %v223 = vld [vmem:[#allocation5 + $0x8] sm:$0xff]
        %v224 = vld [vmem:[#allocation5 + $0x10] sm:$0xff]
        %v225 = vld [vmem:[#allocation5 + $0x18] sm:$0xff]
        %v226 = vld [vmem:[#allocation7] sm:$0x1]
        %v227 = vlaneseq
        %v228 = vshrl.u32 %v227, 7
        %v229 = vsub.s32 0, %v228
        %v230 = vrot.slane %v226, %v229
        %vm231 = vcmask 261120
        %v233 = vsel %vm231, %v220, 0
        %v236 = vsel %vm231, %v221, 0
        %238 = vmatprep.subr.mxu0 0.0
        %239 = vmatpush1.msra.mxu0 %v222
        %240 = vmatprep.subr.mxu0 0.0
        %241 = vmatpush1.msra.mxu0 %v223
        %242 = vmatprep.subr.mxu0 0.0
        %243 = vmatpush1.msra.mxu0 %v224
        %244 = vmatprep.subr.mxu0 0.0
        %245 = vmatpush1.msra.mxu0 %v225
        %246 = vmatprep.subr.mxu0 0.0
        %247 = vmatpush1.msra.mxu0 0.0
        %248 = vmatprep.subr.mxu0 0.0
        %249 = vmatpush1.msra.mxu0 0.0
        %250 = vmatprep.subr.mxu0 0.0
        %251 = vmatpush1.msra.mxu0 0.0
        %252 = vmatprep.subr.mxu0 0.0
        %253 = vmatpush1.msra.mxu0 0.0
        %254 = vmatprep.subr.mxu0 0.0
        %255 = vmatpush1.msra.mxu0 0.0
        %256 = vmatprep.subr.mxu0 0.0
        %257 = vmatpush1.msra.mxu0 0.0
        %258 = vmatprep.subr.mxu0 0.0
        %259 = vmatpush1.msra.mxu0 0.0
        %260 = vmatprep.subr.mxu0 0.0
        %261 = vmatpush1.msra.mxu0 0.0
        %262 = vmatprep.subr.mxu0 0.0
        %263 = vmatpush1.msra.mxu0 0.0
        %264 = vmatprep.subr.mxu0 0.0
        %265 = vmatpush1.msra.mxu0 0.0
        %266 = vmatprep.subr.mxu0 0.0
        %267 = vmatpush1.msra.mxu0 0.0
        %268 = vmatprep.subr.mxu0 0.0
        %269 = vmatpush1.msra.mxu0 0.0
        %270 = vmatprep.subr.mxu0 0.0
        %271 = vmatpush1.msra.mxu0 0.0
        %272 = vmatprep.subr.mxu0 0.0
        %273 = vmatpush1.msra.mxu0 0.0
        %274 = vmatprep.subr.mxu0 0.0
        %275 = vmatpush1.msra.mxu0 0.0
        %276 = vmatprep.subr.mxu0 0.0
        %277 = vmatpush1.msra.mxu0 0.0
        %278 = vmatprep.subr.mxu0 0.0
        %279 = vmatpush1.msra.mxu0 0.0
        %280 = vmatprep.subr.mxu0 0.0
        %281 = vmatpush1.msra.mxu0 0.0
        %282 = vmatprep.subr.mxu0 0.0
        %283 = vmatpush1.msra.mxu0 0.0
        %284 = vmatprep.subr.mxu0 0.0
        %285 = vmatpush1.msra.mxu0 0.0
        %286 = vmatprep.subr.mxu0 0.0
        %287 = vmatpush1.msra.mxu0 0.0
        %288 = vmatprep.subr.mxu0 0.0
        %289 = vmatpush1.msra.mxu0 0.0
        %290 = vmatprep.subr.mxu0 0.0
        %291 = vmatpush1.msra.mxu0 0.0
        %292 = vmatprep.subr.mxu0 0.0
        %293 = vmatpush1.msra.mxu0 0.0
        %294 = vmatprep.subr.mxu0 0.0
        %295 = vmatpush1.msra.mxu0 0.0
        %296 = vmatprep.subr.mxu0 0.0
        %297 = vmatpush1.msra.mxu0 0.0
        %298 = vmatprep.subr.mxu0 0.0
        %299 = vmatpush1.msra.mxu0 0.0
        %300 = vmatprep.subr.mxu0 0.0
        %301 = vmatpush1.msra.mxu0 0.0
        %302 = vmatprep.mubr.f32.mxu0 0.0
        %303 = vmatmul.mubr.f32.gmra.mrb[0].mxu0 %v233
        %v304 = vpop.f32.mrb[0].mxu0
        %v305 = vadd.f32 %v230, %v304
        %v306 = vpop.f32.mrb[0].mxu0
        %307 = vmatprep.mubr.f32.mxu0 0.0
        %308 = vmatmul.mubr.f32.gmra.mrb[0].mxu0 %v236
        %v309 = vpop.f32.mrb[0].mxu0
        %v310 = vadd.f32 %v230, %v309
        %v311 = vpop.f32.mrb[0].mxu0
        %312 = vdwg.mxu0
        %v313 = vld [vmem:[#allocation7 + $0x1] sm:$0x1]
        %v314 = vld [vmem:[#allocation7 + $0x2] sm:$0x1]
        %v315 = vsel %vm231, %v305, 0.0
        %316 = vadd.xlane.f32.xlu0 %v315
        %v317 = vpop.xlane.xlu0 %316
        %v318 = vsel %vm231, %v310, 0.0
        %319 = vadd.xlane.f32.xlu0 %v318
        %v320 = vpop.xlane.xlu0 %319
        %v321 = vrcp.pop 32.0
        %v322 = vmul.f32 %v317, %v321
        %v323 = vmul.f32 %v320, %v321
        %v324 = vsub.f32 %v305, %v322
        %v325 = vsub.f32 %v310, %v323
        %v326 = vmul.f32 %v324, %v324
        %v327 = vmul.f32 %v325, %v325
        %v328 = vsel %vm231, %v326, 0.0
        %329 = vadd.xlane.f32.xlu0 %v328
        %v330 = vpop.xlane.xlu0 %329
        %v331 = vsel %vm231, %v327, 0.0
        %332 = vadd.xlane.f32.xlu0 %v331
        %v333 = vpop.xlane.xlu0 %332
        %v334 = vmul.f32 %v330, %v321
        %v335 = vmul.f32 %v333, %v321
        %v336 = vadd.f32 %v334, 1e-05
        %v337 = vadd.f32 %v335, 1e-05
        %v338 = vrsqrt.pop %v336
        %v339 = vrsqrt.pop %v337
        %v340 = vmul.f32 %v324, %v338
        %v341 = vmul.f32 %v325, %v339
        %v342 = vlaneseq
        %v343 = vshrl.u32 %v342, 7
        %v344 = vsub.s32 0, %v343
        %v345 = vrot.slane %v313, %v344
        %v346 = vmul.f32 %v340, %v345
        %v347 = vmul.f32 %v341, %v345
        %v348 = vlaneseq
        %v349 = vshrl.u32 %v348, 7
        %v350 = vsub.s32 0, %v349
        %v351 = vrot.slane %v314, %v350
        %v352 = vadd.f32 %v346, %v351
        %v353 = vadd.f32 %v347, %v351
        %v354 = vmax.f32 %v352, 0.0
        %v355 = vmax.f32 %v353, 0.0
        %s356 = scalar_lea.vmem [#allocation5], 32
        %v357 = vld [vmem:[%s356] sm:$0xff]
        %v358 = vld [vmem:[%s356 + $0x8] sm:$0xff]
        %v359 = vld [vmem:[%s356 + $0x10] sm:$0xff]
        %v360 = vld [vmem:[%s356 + $0x18] sm:$0xff]
        %v361 = vld [vmem:[#allocation7 + $0x3] sm:$0x1]
        %v362 = vlaneseq
        %v363 = vshrl.u32 %v362, 7
        %v364 = vsub.s32 0, %v363
        %v365 = vrot.slane %v361, %v364
        %v367 = vsel %vm231, %v354, 0
        %v370 = vsel %vm231, %v355, 0
        %372 = vmatprep.subr.mxu0 0.0
        %373 = vmatpush1.msra.mxu0 %v357
        %374 = vmatprep.subr.mxu0 0.0
        %375 = vmatpush1.msra.mxu0 %v358
        %376 = vmatprep.subr.mxu0 0.0
        %377 = vmatpush1.msra.mxu0 %v359
        %378 = vmatprep.subr.mxu0 0.0
        %379 = vmatpush1.msra.mxu0 %v360
        %380 = vmatprep.subr.mxu0 0.0
        %381 = vmatpush1.msra.mxu0 0.0
        %382 = vmatprep.subr.mxu0 0.0
        %383 = vmatpush1.msra.mxu0 0.0
        %384 = vmatprep.subr.mxu0 0.0
        %385 = vmatpush1.msra.mxu0 0.0
        %386 = vmatprep.subr.mxu0 0.0
        %387 = vmatpush1.msra.mxu0 0.0
        %388 = vmatprep.subr.mxu0 0.0
        %389 = vmatpush1.msra.mxu0 0.0
        %390 = vmatprep.subr.mxu0 0.0
        %391 = vmatpush1.msra.mxu0 0.0
        %392 = vmatprep.subr.mxu0 0.0
        %393 = vmatpush1.msra.mxu0 0.0
        %394 = vmatprep.subr.mxu0 0.0
        %395 = vmatpush1.msra.mxu0 0.0
        %396 = vmatprep.subr.mxu0 0.0
        %397 = vmatpush1.msra.mxu0 0.0
        %398 = vmatprep.subr.mxu0 0.0
        %399 = vmatpush1.msra.mxu0 0.0
        %400 = vmatprep.subr.mxu0 0.0
        %401 = vmatpush1.msra.mxu0 0.0
        %402 = vmatprep.subr.mxu0 0.0
        %403 = vmatpush1.msra.mxu0 0.0
        %404 = vmatprep.subr.mxu0 0.0
        %405 = vmatpush1.msra.mxu0 0.0
        %406 = vmatprep.subr.mxu0 0.0
        %407 = vmatpush1.msra.mxu0 0.0
        %408 = vmatprep.subr.mxu0 0.0
        %409 = vmatpush1.msra.mxu0 0.0
        %410 = vmatprep.subr.mxu0 0.0
        %411 = vmatpush1.msra.mxu0 0.0
        %412 = vmatprep.subr.mxu0 0.0
        %413 = vmatpush1.msra.mxu0 0.0
        %414 = vmatprep.subr.mxu0 0.0
        %415 = vmatpush1.msra.mxu0 0.0
        %416 = vmatprep.subr.mxu0 0.0
        %417 = vmatpush1.msra.mxu0 0.0
        %418 = vmatprep.subr.mxu0 0.0
        %419 = vmatpush1.msra.mxu0 0.0
        %420 = vmatprep.subr.mxu0 0.0
        %421 = vmatpush1.msra.mxu0 0.0
        %422 = vmatprep.subr.mxu0 0.0
        %423 = vmatpush1.msra.mxu0 0.0
        %424 = vmatprep.subr.mxu0 0.0
        %425 = vmatpush1.msra.mxu0 0.0
        %426 = vmatprep.subr.mxu0 0.0
        %427 = vmatpush1.msra.mxu0 0.0
        %428 = vmatprep.subr.mxu0 0.0
        %429 = vmatpush1.msra.mxu0 0.0
        %430 = vmatprep.subr.mxu0 0.0
        %431 = vmatpush1.msra.mxu0 0.0
        %432 = vmatprep.subr.mxu0 0.0
        %433 = vmatpush1.msra.mxu0 0.0
        %434 = vmatprep.subr.mxu0 0.0
        %435 = vmatpush1.msra.mxu0 0.0
        %436 = vmatprep.mubr.f32.mxu0 0.0
        %437 = vmatmul.mubr.f32.gmra.mrb[0].mxu0 %v367
        %v438 = vpop.f32.mrb[0].mxu0
        %v439 = vadd.f32 %v365, %v438
        %v440 = vpop.f32.mrb[0].mxu0
        %441 = vmatprep.mubr.f32.mxu0 0.0
        %442 = vmatmul.mubr.f32.gmra.mrb[0].mxu0 %v370
        %v443 = vpop.f32.mrb[0].mxu0
        %v444 = vadd.f32 %v365, %v443
        %v445 = vpop.f32.mrb[0].mxu0
        %446 = vdwg.mxu0
        %v447 = vld [vmem:[#allocation7 + $0x4] sm:$0x1]
        %v448 = vld [vmem:[#allocation7 + $0x5] sm:$0x1]
        %v449 = vsel %vm231, %v439, 0.0
        %450 = vadd.xlane.f32.xlu0 %v449
        %v451 = vpop.xlane.xlu0 %450
        %v452 = vsel %vm231, %v444, 0.0
        %453 = vadd.xlane.f32.xlu0 %v452
        %v454 = vpop.xlane.xlu0 %453
        %v455 = vmul.f32 %v451, %v321
        %v456 = vmul.f32 %v454, %v321
        %v457 = vsub.f32 %v439, %v455
        %v458 = vsub.f32 %v444, %v456
        %v459 = vmul.f32 %v457, %v457
        %v460 = vmul.f32 %v458, %v458
        %v461 = vsel %vm231, %v459, 0.0
        %462 = vadd.xlane.f32.xlu0 %v461
        %v463 = vpop.xlane.xlu0 %462
        %v464 = vsel %vm231, %v460, 0.0
        %465 = vadd.xlane.f32.xlu0 %v464
        %v466 = vpop.xlane.xlu0 %465
        %v467 = vmul.f32 %v463, %v321
        %v468 = vmul.f32 %v466, %v321
        %v469 = vadd.f32 %v467, 1e-05
        %v470 = vadd.f32 %v468, 1e-05
        %v471 = vrsqrt.pop %v469
        %v472 = vrsqrt.pop %v470
        %v473 = vmul.f32 %v457, %v471
        %v474 = vmul.f32 %v458, %v472
        %v475 = vlaneseq
        %v476 = vshrl.u32 %v475, 7
        %v477 = vsub.s32 0, %v476
        %v478 = vrot.slane %v447, %v477
        %v479 = vmul.f32 %v473, %v478
        %v480 = vmul.f32 %v474, %v478
        %v481 = vlaneseq
        %v482 = vshrl.u32 %v481, 7
        %v483 = vsub.s32 0, %v482
        %v484 = vrot.slane %v448, %v483
        %v485 = vadd.f32 %v479, %v484
        %v486 = vadd.f32 %v480, %v484
        %v487 = vmax.f32 %v485, 0.0
        %v488 = vmax.f32 %v486, 0.0
        %v489 = vsel %vm231, %v487, -inf
        %v490 = vsel %vm231, %v488, -inf
        %v491 = vmax.f32 %v489, %v490
        %v492 = vrot.slane %v491, 4
        %v493 = vmax.f32 %v491, %v492
        %v494 = vrot.slane %v493, 2
        %v495 = vmax.f32 %v493, %v494
        %v496 = vrot.slane %v495, 1
        %v497 = vmax.f32 %v495, %v496
        %s498 = scalar_lea.vmem [#allocation5], 64
        %v499 = vld [vmem:[%s498] sm:$0xff]
        %v500 = vld [vmem:[%s498 + $0x8] sm:$0xff]
        %v501 = vld [vmem:[%s498 + $0x10] sm:$0xff]
        %v502 = vld [vmem:[%s498 + $0x18] sm:$0xff]
        %v504 = vsel %vm231, %v487, 0
        %v507 = vsel %vm231, %v488, 0
        %509 = vmatprep.subr.mxu0 0.0
        %510 = vmatpush1.msra.mxu0 %v499
        %511 = vmatprep.subr.mxu0 0.0
        %512 = vmatpush1.msra.mxu0 %v500
        %513 = vmatprep.subr.mxu0 0.0
        %514 = vmatpush1.msra.mxu0 %v501
        %515 = vmatprep.subr.mxu0 0.0
        %516 = vmatpush1.msra.mxu0 %v502
        %517 = vmatprep.subr.mxu0 0.0
        %518 = vmatpush1.msra.mxu0 0.0
        %519 = vmatprep.subr.mxu0 0.0
        %520 = vmatpush1.msra.mxu0 0.0
        %521 = vmatprep.subr.mxu0 0.0
        %522 = vmatpush1.msra.mxu0 0.0
        %523 = vmatprep.subr.mxu0 0.0
        %524 = vmatpush1.msra.mxu0 0.0
        %525 = vmatprep.subr.mxu0 0.0
        %526 = vmatpush1.msra.mxu0 0.0
        %527 = vmatprep.subr.mxu0 0.0
        %528 = vmatpush1.msra.mxu0 0.0
        %529 = vmatprep.subr.mxu0 0.0
        %530 = vmatpush1.msra.mxu0 0.0
        %531 = vmatprep.subr.mxu0 0.0
        %532 = vmatpush1.msra.mxu0 0.0
        %533 = vmatprep.subr.mxu0 0.0
        %534 = vmatpush1.msra.mxu0 0.0
        %535 = vmatprep.subr.mxu0 0.0
        %536 = vmatpush1.msra.mxu0 0.0
        %537 = vmatprep.subr.mxu0 0.0
        %538 = vmatpush1.msra.mxu0 0.0
        %539 = vmatprep.subr.mxu0 0.0
        %540 = vmatpush1.msra.mxu0 0.0
        %541 = vmatprep.subr.mxu0 0.0
        %542 = vmatpush1.msra.mxu0 0.0
        %543 = vmatprep.subr.mxu0 0.0
        %544 = vmatpush1.msra.mxu0 0.0
        %545 = vmatprep.subr.mxu0 0.0
        %546 = vmatpush1.msra.mxu0 0.0
        %547 = vmatprep.subr.mxu0 0.0
        %548 = vmatpush1.msra.mxu0 0.0
        %549 = vmatprep.subr.mxu0 0.0
        %550 = vmatpush1.msra.mxu0 0.0
        %551 = vmatprep.subr.mxu0 0.0
        %552 = vmatpush1.msra.mxu0 0.0
        %553 = vmatprep.subr.mxu0 0.0
        %554 = vmatpush1.msra.mxu0 0.0
        %555 = vmatprep.subr.mxu0 0.0
        %556 = vmatpush1.msra.mxu0 0.0
        %557 = vmatprep.subr.mxu0 0.0
        %558 = vmatpush1.msra.mxu0 0.0
        %559 = vmatprep.subr.mxu0 0.0
        %560 = vmatpush1.msra.mxu0 0.0
        %561 = vmatprep.subr.mxu0 0.0
        %562 = vmatpush1.msra.mxu0 0.0
        %563 = vmatprep.subr.mxu0 0.0
        %564 = vmatpush1.msra.mxu0 0.0
        %565 = vmatprep.subr.mxu0 0.0
        %566 = vmatpush1.msra.mxu0 0.0
        %567 = vmatprep.subr.mxu0 0.0
        %568 = vmatpush1.msra.mxu0 0.0
        %569 = vmatprep.subr.mxu0 0.0
        %570 = vmatpush1.msra.mxu0 0.0
        %571 = vmatprep.subr.mxu0 0.0
        %572 = vmatpush1.msra.mxu0 0.0
        %573 = vmatprep.mubr.f32.mxu0 0.0
        %574 = vmatmul.mubr.f32.gmra.mrb[0].mxu0 %v504
        %v575 = vpop.f32.mrb[0].mxu0
        %v576 = vadd.f32 0.0, %v575
        %v577 = vpop.f32.mrb[0].mxu0
        %578 = vmatprep.mubr.f32.mxu0 0.0
        %579 = vmatmul.mubr.f32.gmra.mrb[0].mxu0 %v507
        %v580 = vpop.f32.mrb[0].mxu0
        %v581 = vadd.f32 0.0, %v580
        %v582 = vpop.f32.mrb[0].mxu0
        %583 = vdwg.mxu0
        %s584 = scalar_lea.vmem [#allocation5], 96
        %v585 = vld [vmem:[%s584] sm:$0xff]
        %v586 = vld [vmem:[%s584 + $0x8] sm:$0xff]
        %v587 = vld [vmem:[%s584 + $0x10] sm:$0xff]
        %v588 = vld [vmem:[%s584 + $0x18] sm:$0xff]
        %v590 = vsel %vm231, %v497, 0
        %592 = vmatprep.subr.mxu0 0.0
        %593 = vmatpush1.msra.mxu0 %v585
        %594 = vmatprep.subr.mxu0 0.0
        %595 = vmatpush1.msra.mxu0 %v586
        %596 = vmatprep.subr.mxu0 0.0
        %597 = vmatpush1.msra.mxu0 %v587
        %598 = vmatprep.subr.mxu0 0.0
        %599 = vmatpush1.msra.mxu0 %v588
        %600 = vmatprep.subr.mxu0 0.0
        %601 = vmatpush1.msra.mxu0 0.0
        %602 = vmatprep.subr.mxu0 0.0
        %603 = vmatpush1.msra.mxu0 0.0
        %604 = vmatprep.subr.mxu0 0.0
        %605 = vmatpush1.msra.mxu0 0.0
        %606 = vmatprep.subr.mxu0 0.0
        %607 = vmatpush1.msra.mxu0 0.0
        %608 = vmatprep.subr.mxu0 0.0
        %609 = vmatpush1.msra.mxu0 0.0
        %610 = vmatprep.subr.mxu0 0.0
        %611 = vmatpush1.msra.mxu0 0.0
        %612 = vmatprep.subr.mxu0 0.0
        %613 = vmatpush1.msra.mxu0 0.0
        %614 = vmatprep.subr.mxu0 0.0
        %615 = vmatpush1.msra.mxu0 0.0
        %616 = vmatprep.subr.mxu0 0.0
        %617 = vmatpush1.msra.mxu0 0.0
        %618 = vmatprep.subr.mxu0 0.0
        %619 = vmatpush1.msra.mxu0 0.0
        %620 = vmatprep.subr.mxu0 0.0
        %621 = vmatpush1.msra.mxu0 0.0
        %622 = vmatprep.subr.mxu0 0.0
        %623 = vmatpush1.msra.mxu0 0.0
        %624 = vmatprep.subr.mxu0 0.0
        %625 = vmatpush1.msra.mxu0 0.0
        %626 = vmatprep.subr.mxu0 0.0
        %627 = vmatpush1.msra.mxu0 0.0
        %628 = vmatprep.subr.mxu0 0.0
        %629 = vmatpush1.msra.mxu0 0.0
        %630 = vmatprep.subr.mxu0 0.0
        %631 = vmatpush1.msra.mxu0 0.0
        %632 = vmatprep.subr.mxu0 0.0
        %633 = vmatpush1.msra.mxu0 0.0
        %634 = vmatprep.subr.mxu0 0.0
        %635 = vmatpush1.msra.mxu0 0.0
        %636 = vmatprep.subr.mxu0 0.0
        %637 = vmatpush1.msra.mxu0 0.0
        %638 = vmatprep.subr.mxu0 0.0
        %639 = vmatpush1.msra.mxu0 0.0
        %640 = vmatprep.subr.mxu0 0.0
        %641 = vmatpush1.msra.mxu0 0.0
        %642 = vmatprep.subr.mxu0 0.0
        %643 = vmatpush1.msra.mxu0 0.0
        %644 = vmatprep.subr.mxu0 0.0
        %645 = vmatpush1.msra.mxu0 0.0
        %646 = vmatprep.subr.mxu0 0.0
        %647 = vmatpush1.msra.mxu0 0.0
        %648 = vmatprep.subr.mxu0 0.0
        %649 = vmatpush1.msra.mxu0 0.0
        %650 = vmatprep.subr.mxu0 0.0
        %651 = vmatpush1.msra.mxu0 0.0
        %652 = vmatprep.subr.mxu0 0.0
        %653 = vmatpush1.msra.mxu0 0.0
        %654 = vmatprep.subr.mxu0 0.0
        %655 = vmatpush1.msra.mxu0 0.0
        %656 = vmatprep.mubr.f32.mxu0 0.0
        %657 = vmatmul.mubr.f32.gmra.mrb[0].mxu0 %v590
        %v658 = vpop.f32.mrb[0].mxu0
        %v659 = vadd.f32 0.0, %v658
        %v660 = vpop.f32.mrb[0].mxu0
        %661 = vdwg.mxu0
        %v662 = vlaneseq
        %v663 = vshrl.u32 %v662, 7
        %v664 = vsub.s32 0, %v663
        %v665 = vrot.slane %v659, %v664
        %v666 = vadd.f32 %v576, %v665
        %v667 = vadd.f32 %v581, %v665
        %v668 = vld [vmem:[#allocation7 + $0x6] sm:$0x1]
        %v669 = vlaneseq
        %v670 = vshrl.u32 %v669, 7
        %v671 = vsub.s32 0, %v670
        %v672 = vrot.slane %v668, %v671
        %v673 = vadd.f32 %v666, %v672
        %v674 = vadd.f32 %v667, %v672
        %v675 = vld [vmem:[#allocation7 + $0x7] sm:$0x1]
        %v676 = vld [vmem:[#allocation7 + $0x8] sm:$0x1]
        %v677 = vsel %vm231, %v673, 0.0
        %678 = vadd.xlane.f32.xlu0 %v677
        %v679 = vpop.xlane.xlu0 %678
        %v680 = vsel %vm231, %v674, 0.0
        %681 = vadd.xlane.f32.xlu0 %v680
        %v682 = vpop.xlane.xlu0 %681
        %v683 = vmul.f32 %v679, %v321
        %v684 = vmul.f32 %v682, %v321
        %v685 = vsub.f32 %v673, %v683
        %v686 = vsub.f32 %v674, %v684
        %v687 = vmul.f32 %v685, %v685
        %v688 = vmul.f32 %v686, %v686
        %v689 = vsel %vm231, %v687, 0.0
        %690 = vadd.xlane.f32.xlu0 %v689
        %v691 = vpop.xlane.xlu0 %690
        %v692 = vsel %vm231, %v688, 0.0
        %693 = vadd.xlane.f32.xlu0 %v692
        %v694 = vpop.xlane.xlu0 %693
        %v695 = vmul.f32 %v691, %v321
        %v696 = vmul.f32 %v694, %v321
        %v697 = vadd.f32 %v695, 1e-05
        %v698 = vadd.f32 %v696, 1e-05
        %v699 = vrsqrt.pop %v697
        %v700 = vrsqrt.pop %v698
        %v701 = vmul.f32 %v685, %v699
        %v702 = vmul.f32 %v686, %v700
        %v703 = vlaneseq
        %v704 = vshrl.u32 %v703, 7
        %v705 = vsub.s32 0, %v704
        %v706 = vrot.slane %v675, %v705
        %v707 = vmul.f32 %v701, %v706
        %v708 = vmul.f32 %v702, %v706
        %v709 = vlaneseq
        %v710 = vshrl.u32 %v709, 7
        %v711 = vsub.s32 0, %v710
        %v712 = vrot.slane %v676, %v711
        %v713 = vadd.f32 %v707, %v712
        %v714 = vadd.f32 %v708, %v712
        %v715 = vmax.f32 %v713, 0.0
        %v716 = vmax.f32 %v714, 0.0
        %s717 = scalar_lea.vmem [#allocation5], 128
        %v718 = vld [vmem:[%s717] sm:$0xff]
        %v719 = vld [vmem:[%s717 + $0x8] sm:$0xff]
        %v720 = vld [vmem:[%s717 + $0x10] sm:$0xff]
        %v721 = vld [vmem:[%s717 + $0x18] sm:$0xff]
        %v722 = vld [vmem:[#allocation7 + $0x9] sm:$0x1]
        %v723 = vlaneseq
        %v724 = vshrl.u32 %v723, 7
        %v725 = vsub.s32 0, %v724
        %v726 = vrot.slane %v722, %v725
        %v728 = vsel %vm231, %v715, 0
        %v731 = vsel %vm231, %v716, 0
        %733 = vmatprep.subr.mxu0 0.0
        %734 = vmatpush1.msra.mxu0 %v718
        %735 = vmatprep.subr.mxu0 0.0
        %736 = vmatpush1.msra.mxu0 %v719
        %737 = vmatprep.subr.mxu0 0.0
        %738 = vmatpush1.msra.mxu0 %v720
        %739 = vmatprep.subr.mxu0 0.0
        %740 = vmatpush1.msra.mxu0 %v721
        %741 = vmatprep.subr.mxu0 0.0
        %742 = vmatpush1.msra.mxu0 0.0
        %743 = vmatprep.subr.mxu0 0.0
        %744 = vmatpush1.msra.mxu0 0.0
        %745 = vmatprep.subr.mxu0 0.0
        %746 = vmatpush1.msra.mxu0 0.0
        %747 = vmatprep.subr.mxu0 0.0
        %748 = vmatpush1.msra.mxu0 0.0
        %749 = vmatprep.subr.mxu0 0.0
        %750 = vmatpush1.msra.mxu0 0.0
        %751 = vmatprep.subr.mxu0 0.0
        %752 = vmatpush1.msra.mxu0 0.0
        %753 = vmatprep.subr.mxu0 0.0
        %754 = vmatpush1.msra.mxu0 0.0
        %755 = vmatprep.subr.mxu0 0.0
        %756 = vmatpush1.msra.mxu0 0.0
        %757 = vmatprep.subr.mxu0 0.0
        %758 = vmatpush1.msra.mxu0 0.0
        %759 = vmatprep.subr.mxu0 0.0
        %760 = vmatpush1.msra.mxu0 0.0
        %761 = vmatprep.subr.mxu0 0.0
        %762 = vmatpush1.msra.mxu0 0.0
        %763 = vmatprep.subr.mxu0 0.0
        %764 = vmatpush1.msra.mxu0 0.0
        %765 = vmatprep.subr.mxu0 0.0
        %766 = vmatpush1.msra.mxu0 0.0
        %767 = vmatprep.subr.mxu0 0.0
        %768 = vmatpush1.msra.mxu0 0.0
        %769 = vmatprep.subr.mxu0 0.0
        %770 = vmatpush1.msra.mxu0 0.0
        %771 = vmatprep.subr.mxu0 0.0
        %772 = vmatpush1.msra.mxu0 0.0
        %773 = vmatprep.subr.mxu0 0.0
        %774 = vmatpush1.msra.mxu0 0.0
        %775 = vmatprep.subr.mxu0 0.0
        %776 = vmatpush1.msra.mxu0 0.0
        %777 = vmatprep.subr.mxu0 0.0
        %778 = vmatpush1.msra.mxu0 0.0
        %779 = vmatprep.subr.mxu0 0.0
        %780 = vmatpush1.msra.mxu0 0.0
        %781 = vmatprep.subr.mxu0 0.0
        %782 = vmatpush1.msra.mxu0 0.0
        %783 = vmatprep.subr.mxu0 0.0
        %784 = vmatpush1.msra.mxu0 0.0
        %785 = vmatprep.subr.mxu0 0.0
        %786 = vmatpush1.msra.mxu0 0.0
        %787 = vmatprep.subr.mxu0 0.0
        %788 = vmatpush1.msra.mxu0 0.0
        %789 = vmatprep.subr.mxu0 0.0
        %790 = vmatpush1.msra.mxu0 0.0
        %791 = vmatprep.subr.mxu0 0.0
        %792 = vmatpush1.msra.mxu0 0.0
        %793 = vmatprep.subr.mxu0 0.0
        %794 = vmatpush1.msra.mxu0 0.0
        %795 = vmatprep.subr.mxu0 0.0
        %796 = vmatpush1.msra.mxu0 0.0
        %797 = vmatprep.mubr.f32.mxu0 0.0
        %798 = vmatmul.mubr.f32.gmra.mrb[0].mxu0 %v728
        %v799 = vpop.f32.mrb[0].mxu0
        %v800 = vadd.f32 %v726, %v799
        %v801 = vpop.f32.mrb[0].mxu0
        %802 = vmatprep.mubr.f32.mxu0 0.0
        %803 = vmatmul.mubr.f32.gmra.mrb[0].mxu0 %v731
        %v804 = vpop.f32.mrb[0].mxu0
        %v805 = vadd.f32 %v726, %v804
        %v806 = vpop.f32.mrb[0].mxu0
        %807 = vdwg.mxu0
        %v808 = vld [vmem:[#allocation7 + $0xa] sm:$0x1]
        %v809 = vld [vmem:[#allocation7 + $0xb] sm:$0x1]
        %v810 = vsel %vm231, %v800, 0.0
        %811 = vadd.xlane.f32.xlu0 %v810
        %v812 = vpop.xlane.xlu0 %811
        %v813 = vsel %vm231, %v805, 0.0
        %814 = vadd.xlane.f32.xlu0 %v813
        %v815 = vpop.xlane.xlu0 %814
        %v816 = vmul.f32 %v812, %v321
        %v817 = vmul.f32 %v815, %v321
        %v818 = vsub.f32 %v800, %v816
        %v819 = vsub.f32 %v805, %v817
        %v820 = vmul.f32 %v818, %v818
        %v821 = vmul.f32 %v819, %v819
        %v822 = vsel %vm231, %v820, 0.0
        %823 = vadd.xlane.f32.xlu0 %v822
        %v824 = vpop.xlane.xlu0 %823
        %v825 = vsel %vm231, %v821, 0.0
        %826 = vadd.xlane.f32.xlu0 %v825
        %v827 = vpop.xlane.xlu0 %826
        %v828 = vmul.f32 %v824, %v321
        %v829 = vmul.f32 %v827, %v321
        %v830 = vadd.f32 %v828, 1e-05
        %v831 = vadd.f32 %v829, 1e-05
        %v832 = vrsqrt.pop %v830
        %v833 = vrsqrt.pop %v831
        %v834 = vmul.f32 %v818, %v832
        %v835 = vmul.f32 %v819, %v833
        %v836 = vlaneseq
        %v837 = vshrl.u32 %v836, 7
        %v838 = vsub.s32 0, %v837
        %v839 = vrot.slane %v808, %v838
        %v840 = vmul.f32 %v834, %v839
        %v841 = vmul.f32 %v835, %v839
        %v842 = vlaneseq
        %v843 = vshrl.u32 %v842, 7
        %v844 = vsub.s32 0, %v843
        %v845 = vrot.slane %v809, %v844
        %v846 = vadd.f32 %v840, %v845
        %v847 = vadd.f32 %v841, %v845
        %v848 = vmax.f32 %v846, 0.0
        %v849 = vmax.f32 %v847, 0.0
        %v850 = vadd.f32 %v220, %v848
        %v851 = vadd.f32 %v221, %v849
        %v852 = vld [vmem:[#allocation7 + $0xc] sm:$0x1]
        %v853 = vld [vmem:[#allocation7 + $0xd] sm:$0x1]
        %v854 = vsel %vm231, %v850, 0.0
        %855 = vadd.xlane.f32.xlu0 %v854
        %v856 = vpop.xlane.xlu0 %855
        %v857 = vsel %vm231, %v851, 0.0
        %858 = vadd.xlane.f32.xlu0 %v857
        %v859 = vpop.xlane.xlu0 %858
        %v860 = vmul.f32 %v856, %v321
        %v861 = vmul.f32 %v859, %v321
        %v862 = vsub.f32 %v850, %v860
        %v863 = vsub.f32 %v851, %v861
        %v864 = vmul.f32 %v862, %v862
        %v865 = vmul.f32 %v863, %v863
        %v866 = vsel %vm231, %v864, 0.0
        %867 = vadd.xlane.f32.xlu0 %v866
        %v868 = vpop.xlane.xlu0 %867
        %v869 = vsel %vm231, %v865, 0.0
        %870 = vadd.xlane.f32.xlu0 %v869
        %v871 = vpop.xlane.xlu0 %870
        %v872 = vmul.f32 %v868, %v321
        %v873 = vmul.f32 %v871, %v321
        %v874 = vadd.f32 %v872, 1e-05
        %v875 = vadd.f32 %v873, 1e-05
        %v876 = vrsqrt.pop %v874
        %v877 = vrsqrt.pop %v875
        %v878 = vmul.f32 %v862, %v876
        %v879 = vmul.f32 %v863, %v877
        %v880 = vlaneseq
        %v881 = vshrl.u32 %v880, 7
        %v882 = vsub.s32 0, %v881
        %v883 = vrot.slane %v852, %v882
        %v884 = vmul.f32 %v878, %v883
        %v885 = vmul.f32 %v879, %v883
        %v886 = vlaneseq
        %v887 = vshrl.u32 %v886, 7
        %v888 = vsub.s32 0, %v887
        %v889 = vrot.slane %v853, %v888
        %v890 = vadd.f32 %v884, %v889
        %v891 = vadd.f32 %v885, %v889
        %892 = vst.msk [vmem:[%s217] sm:$0xff] %vm231, %v890
        %893 = vst.msk [vmem:[%s217 + $0x8] sm:$0xff] %vm231, %v891
        %s894 = sand.u32 %s97, 1
        %s895 = scalar_lea.sflag [#allocation4], %s894
        %s896 = sand.u32 %s97, 1
        %s897 = smul.addr %s896, 16
        %s898 = scalar_lea.vmem [#allocation8], %s897
        // Predicated region
        $region45: #{tpu_custom_call.1} parent=31 // pred_check
          %p899 = pneg %p107
        $region46: #{tpu_custom_call.1} parent=31 // pred_check_branch
          %901 = sbr.rel (%p899) target = $region48
        $region47: #{tpu_custom_call.1} parent=31 // pred_region
          %s902 = smul.u32 2, %s21
          %s904 = ssub.s32 256, 256
          %905 = vsyncadd %s895, %s904
          %s906 = smul.addr %s902, 128
          %s907 = scalar_lea.hbm %s3, %s906
          %s908 = sshll.u32 %s898, 4
          %s909 = int_to_ptr.vmem [resolvable:$true] %s908
          %914 = dma.vmem_to_hbm [thread:$0]  %s909, 256, %s907, %s895, 128, 128, 8
        $region48: #{tpu_custom_call.1} parent=31 // pred_fallthru
          _
      $region32: #{tpu_custom_call.1} parent=5 // pred_fallthru
        _
      %p915 = scmp.le.s32.totalorder 2, %s16
      // Predicated region
      $region49: #{tpu_custom_call.1} parent=5 // pred_check
        %p916 = pneg %p915
      $region50: #{tpu_custom_call.1} parent=5 // pred_check_branch
        %918 = sbr.rel (%p916) target = $region52
      $region51: #{tpu_custom_call.1} parent=5 // pred_region
        %s919 = ssub.s32 %s16, 2
        // Predicated region
        $region53: #{tpu_custom_call.1} parent=51 // pred_check
          %p920 = pneg %p113
        $region54: #{tpu_custom_call.1} parent=51 // pred_check_branch
          %922 = sbr.rel (%p920) target = $region56
        $region55: #{tpu_custom_call.1} parent=51 // pred_region
          %s923 = sand.u32 %s98, 1
          %s924 = scalar_lea.sflag [#allocation4], %s923
          %s925 = sand.u32 %s98, 1
          %s926 = smul.addr %s925, 16
          %s927 = scalar_lea.vmem [#allocation8], %s926
          %928 = dma.done %s924, 256
        $region56: #{tpu_custom_call.1} parent=51 // pred_fallthru
          _
      $region52: #{tpu_custom_call.1} parent=5 // pred_fallthru
        _
    $region6: #{tpu_custom_call.1} parent=1 // loop_footer
      %s20 = sadd.s32 1, %s16
    $region7: #{tpu_custom_call.1} parent=1 // loop_footer_branch
      %15 = sbr.rel target = $region3
    $region8: #{tpu_custom_call.1} parent=1 // loop_exit
      _
    %929 = vsyncpa [#allocation3], 1
    %s930 = scalar_lea.sflag [#allocation3], 1
    %931 = vsyncpa %s930, 1
    %932 = vsyncpa [#allocation6], 1
    %933 = vsyncpa [#allocation4], 1
    %s934 = scalar_lea.sflag [#allocation4], 1
    %935 = vsyncpa %s934, 1

</llo_original>
